<compile_context>
chip_gen: v6e
topology: v6e:2x2x1
jax: 0.10.0
libtpu: 0.0.40
codegen_flags: <defaults>
</compile_context>

<pallas_src>
import math
import functools

import jax
import jax.numpy as jnp
from jax import lax
from jax.experimental import pallas as pl
from jax.experimental.pallas import tpu as pltpu


def _inv_l2_norm_cols(v, eps=1e-12):
    # torch F.normalize(p=2, dim=-1) == x / max(||x||, eps).  Here the feature
    # axis is axis 0 (sublanes); rsqrt on the sum of squares is equivalent for
    # ||x|| >= eps and routes to the EUP slot instead of VPU sqrt + divide.
    sumsq = jnp.sum(v * v, axis=0, keepdims=True)          # (1, TB)
    return lax.rsqrt(jnp.maximum(sumsq, eps * eps))


def hyper_lerp_kernel(x_ref, w1_ref, w2_ref, alpha_ref, o_ref, *, mlp_eps):
    x_t = x_ref[...].astype(jnp.float32)                    # (D, TB) residual, batch on lanes

    # --- HyperMLP (hidden Scaler already folded into w1 rows) ---
    h_t = jnp.dot(w1_ref[...], x_t, preferred_element_type=jnp.float32)   # (H, TB)
    h_t = jnp.maximum(h_t, 0.0) + mlp_eps
    y_t = jnp.dot(w2_ref[...], h_t, preferred_element_type=jnp.float32)   # (D, TB)
    y_t = y_t * _inv_l2_norm_cols(y_t)

    # --- LERP (alpha * forward_scaler pre-folded) + final normalize ---
    a = alpha_ref[...].astype(jnp.float32)                  # (D, 1), broadcasts over lanes
    z_t = x_t + a * (y_t - x_t)
    z_t = z_t * _inv_l2_norm_cols(z_t)

    o_ref[...] = z_t.astype(o_ref.dtype)


def fold_params(w1, scaler1, w2, alpha, *, scaler_init, scaler_scale,
                alpha_init, alpha_scale):
    """One-time parameter transform (do at load time, NOT per forward call).

    w1: (H, D) torch (out, in) weight; scaler1: (H,);
    w2: (D, H) torch (out, in) weight; alpha: (D,).
    Folding the scaler into W1 rows is exact because it precedes the ReLU.
    """
    w1_folded = w1 * (scaler1 * (scaler_init / scaler_scale))[:, None]     # (H, D)
    alpha_col = (alpha * (alpha_init / alpha_scale)).reshape(-1, 1)        # (D, 1)
    return w1_folded, w2, alpha_col


def hyper_lerp_block_fm(x_t, w1_folded, w2, alpha_col, *, mlp_eps=1e-8, tb=None):
    """Feature-major core: x_t (D, B) -> (D, B).  Weights in torch (out, in) layout."""
    D, B = x_t.shape
    H = w1_folded.shape[0]
    assert w1_folded.shape == (H, D)
    assert w2.shape == (D, H)
    assert alpha_col.shape == (D, 1)

    if tb is None:
        # Large lane-dense batch tile: amortizes per-step pipeline overhead.
        # (32, 4096) f32 = 512 KB/block; in+out double-buffered ~2 MB, well
        # under v5e's 16 MiB / v7x's 32 MiB scoped-VMEM defaults.
        tb = 4096
    if tb >= B:
        tb = B                                  # single block == full dim, lane rule waived
    else:
        tb = max(128, (tb // 128) * 128)        # lane-axis blocks must be multiples of 128
    num_tiles = pl.cdiv(B, tb)                  # ragged last tile handled by masking

    kernel = functools.partial(hyper_lerp_kernel, mlp_eps=float(mlp_eps))

    cost = pl.CostEstimate(
        flops=2 * B * D * H * 2,                           # two (B,D,H)-shaped matmuls
        transcendentals=2 * B,                             # two rsqrts per batch element
        bytes_accessed=4 * (2 * B * D + 2 * D * H + D))

    return pl.pallas_call(
        kernel,
        out_shape=jax.ShapeDtypeStruct((D, B), x_t.dtype),
        grid=(num_tiles,),
        in_specs=[
            pl.BlockSpec((D, tb), lambda i: (0, i)),       # x^T tile (pipelined, lane-dense)
            pl.BlockSpec((H, D), lambda i: (0, 0)),        # W1 (scaler folded), VMEM-resident
            pl.BlockSpec((D, H), lambda i: (0, 0)),        # W2, VMEM-resident
            pl.BlockSpec((D, 1), lambda i: (0, 0)),        # alpha column (fwd_scaler folded)
        ],
        out_specs=pl.BlockSpec((D, tb), lambda i: (0, i)),
        compiler_params=pltpu.CompilerParams(
            dimension_semantics=("parallel",)),            # v7x: consider pltpu.CORE_PARALLEL
        cost_estimate=cost,
    )(x_t, w1_folded, w2, alpha_col)


def hyper_lerp_block(x, w1_folded, w2, alpha_col, *, mlp_eps=1e-8, tb=None):
    """Batch-major convenience wrapper matching the torch module: x (B, D) -> (B, D).

    Accepts one wrapper transpose each way; networks that keep activations
    feature-major should call hyper_lerp_block_fm directly and skip both.
    """
    out_t = hyper_lerp_block_fm(x.T, w1_folded, w2, alpha_col, mlp_eps=mlp_eps, tb=tb)
    return out_t.T


def _orthogonal(key, out_dim, in_dim, dtype=jnp.float32):
    # Deterministic orthogonal init (nn.init.orthogonal_, gain=1.0), shape (out, in).
    n, m = max(out_dim, in_dim), min(out_dim, in_dim)
    a = jax.random.normal(key, (n, m), dtype=jnp.float32)
    q, r = jnp.linalg.qr(a)
    q = q * jnp.sign(jnp.diagonal(r))[None, :]
    w = q if out_dim >= in_dim else q.T
    return w.astype(dtype)


if __name__ == "__main__":
    # Small shapes consistent with the module: hidden_dim=32, expansion=4.
    # B=200 with tb=128 exercises the cdiv grid and the ragged (masked) last
    # tile: grid=(2,), tiles of 128 and 72 batch columns.
    B = 200
    hidden_dim = 32
    expansion = 4
    H = hidden_dim * expansion

    # Default hyperparameters as in HyperLERPBlock.__init__ (already / sqrt(expansion)).
    scaler_init = math.sqrt(2.0 / hidden_dim) / math.sqrt(expansion)
    scaler_scale = math.sqrt(2.0 / hidden_dim) / math.sqrt(expansion)
    alpha_init = 1.0 / (hidden_dim + 1)
    alpha_scale = 1.0 / math.sqrt(hidden_dim)

    key = jax.random.PRNGKey(0)
    kx, kw1, kw2 = jax.random.split(key, 3)

    x = jax.random.normal(kx, (B, hidden_dim), dtype=jnp.float32)

    # Orthogonal weights in torch (out, in) layout -- used as-is by the kernel.
    w1 = _orthogonal(kw1, H, hidden_dim)           # (H, D)
    w2 = _orthogonal(kw2, hidden_dim, H)           # (D, H)

    # Scaler parameters: initialized to ones * scale (as in Scaler.__init__).
    scaler1_param = jnp.full((H,), scaler_scale, dtype=jnp.float32)
    alpha_param = jnp.full((hidden_dim,), alpha_scale, dtype=jnp.float32)

    # One-time parameter folding (replaces the Scaler multiplies in the kernel).
    w1_f, w2_f, alpha_f = fold_params(
        w1, scaler1_param, w2, alpha_param,
        scaler_init=scaler_init, scaler_scale=scaler_scale,
        alpha_init=alpha_init, alpha_scale=alpha_scale)
    w1_f, w2_f, alpha_f = jax.block_until_ready((w1_f, w2_f, alpha_f))

    out = hyper_lerp_block(x, w1_f, w2_f, alpha_f, tb=128)
    out = jax.block_until_ready(out)

    # Pure-JAX reference of the original (unfolded) torch math, highest precision.
    hp = jax.lax.Precision.HIGHEST

    def ref(x):
        h = jnp.dot(x, w1.T, precision=hp)
        h = h * (scaler1_param * (scaler_init / scaler_scale))
        h = jnp.maximum(h, 0.0) + 1e-8
        y = jnp.dot(h, w2.T, precision=hp)
        y = y / jnp.maximum(jnp.linalg.norm(y, axis=-1, keepdims=True), 1e-12)
        a = alpha_param * (alpha_init / alpha_scale)
        z = x + a * (y - x)
        return z / jnp.maximum(jnp.linalg.norm(z, axis=-1, keepdims=True), 1e-12)

    # Tolerance covers MXU f32 pass behavior across TPU generations; real layout
    # or folding bugs produce O(1) errors and still fail this check.
    assert jnp.allclose(out, ref(x), atol=2e-3, rtol=2e-3)
    print("KERNEL_OK")
</pallas_src>

<mosaic_0001>
module attributes {stable_mosaic.version = 11 : i64} {
  func.func @hyper_lerp_kernel(%arg0: i32, %arg1: memref<32x128xf32, #tpu.memory_space<vmem>>, %arg2: memref<128x32xf32, #tpu.memory_space<vmem>>, %arg3: memref<32x128xf32, #tpu.memory_space<vmem>>, %arg4: memref<32x1xf32, #tpu.memory_space<vmem>>, %arg5: memref<32x128xf32, #tpu.memory_space<vmem>>) attributes {dimension_semantics = [#tpu.dimension_semantics<parallel>], iteration_bounds = array<i64: 2>, scalar_prefetch = 0 : i64, scratch_operands = 0 : i64, tpu.core_type = #tpu.core_type<tc>, window_params = [{transform_indices = @transform_0, window_bounds = array<i64: 32, 128>}, {pipeline_mode = #tpu.pipeline_mode<synchronous>, transform_indices = @transform_1, window_bounds = array<i64: 128, 32>}, {pipeline_mode = #tpu.pipeline_mode<synchronous>, transform_indices = @transform_2, window_bounds = array<i64: 32, 128>}, {pipeline_mode = #tpu.pipeline_mode<synchronous>, transform_indices = @transform_3, window_bounds = array<i64: 32, 1>}, {transform_indices = @transform_4, window_bounds = array<i64: 32, 128>}]} {
    %c0 = arith.constant 0 : index
    %c0_0 = arith.constant 0 : index
    %0 = vector.load %arg1[%c0, %c0_0] : memref<32x128xf32, #tpu.memory_space<vmem>>, vector<32x128xf32>
    %c0_1 = arith.constant 0 : index
    %c0_2 = arith.constant 0 : index
    %1 = vector.load %arg2[%c0_1, %c0_2] : memref<128x32xf32, #tpu.memory_space<vmem>>, vector<128x32xf32>
    %cst = arith.constant dense<0.000000e+00> : vector<128x128xf32>
    %2 = tpu.matmul %1, %0, %cst {dimension_numbers = #tpu.dot_dimension_numbers<[1], [0], [0], [1], [0, 0, 1, 1], [], []>} : vector<128x32xf32>, vector<32x128xf32>, vector<128x128xf32> -> vector<128x128xf32>
    %cst_3 = arith.constant 0.000000e+00 : f32
    %3 = vector.broadcast %cst_3 : f32 to vector<128x128xf32>
    %4 = arith.maximumf %2, %3 : vector<128x128xf32>
    %cst_4 = arith.constant 9.99999993E-9 : f32
    %5 = vector.broadcast %cst_4 : f32 to vector<128x128xf32>
    %6 = arith.addf %4, %5 : vector<128x128xf32>
    %c0_5 = arith.constant 0 : index
    %c0_6 = arith.constant 0 : index
    %7 = vector.load %arg3[%c0_5, %c0_6] : memref<32x128xf32, #tpu.memory_space<vmem>>, vector<32x128xf32>
    %cst_7 = arith.constant dense<0.000000e+00> : vector<32x128xf32>
    %8 = tpu.matmul %7, %6, %cst_7 {dimension_numbers = #tpu.dot_dimension_numbers<[1], [0], [0], [1], [0, 0, 1, 1], [], []>} : vector<32x128xf32>, vector<128x128xf32>, vector<32x128xf32> -> vector<32x128xf32>
    %9 = arith.mulf %8, %8 : vector<32x128xf32>
    %cst_8 = arith.constant dense<0.000000e+00> : vector<128xf32>
    %10 = vector.multi_reduction <add>, %9, %cst_8 [0] : vector<32x128xf32> to vector<128xf32>
    %11 = vector.shape_cast %10 : vector<128xf32> to vector<1x128xf32>
    %cst_9 = arith.constant 1.000000e-24 : f32
    %12 = vector.broadcast %cst_9 : f32 to vector<1x128xf32>
    %13 = arith.maximumf %11, %12 : vector<1x128xf32>
    %14 = math.rsqrt %13 : vector<1x128xf32>
    %15 = vector.broadcast %14 : vector<1x128xf32> to vector<32x128xf32>
    %16 = arith.mulf %8, %15 : vector<32x128xf32>
    %c0_10 = arith.constant 0 : index
    %c0_11 = arith.constant 0 : index
    %17 = vector.load %arg4[%c0_10, %c0_11] : memref<32x1xf32, #tpu.memory_space<vmem>>, vector<32x1xf32>
    %18 = arith.subf %16, %0 : vector<32x128xf32>
    %19 = vector.broadcast %17 : vector<32x1xf32> to vector<32x128xf32>
    %20 = arith.mulf %19, %18 : vector<32x128xf32>
    %21 = arith.addf %0, %20 : vector<32x128xf32>
    %22 = arith.mulf %21, %21 : vector<32x128xf32>
    %cst_12 = arith.constant dense<0.000000e+00> : vector<128xf32>
    %23 = vector.multi_reduction <add>, %22, %cst_12 [0] : vector<32x128xf32> to vector<128xf32>
    %24 = vector.shape_cast %23 : vector<128xf32> to vector<1x128xf32>
    %cst_13 = arith.constant 1.000000e-24 : f32
    %25 = vector.broadcast %cst_13 : f32 to vector<1x128xf32>
    %26 = arith.maximumf %24, %25 : vector<1x128xf32>
    %27 = math.rsqrt %26 : vector<1x128xf32>
    %28 = vector.broadcast %27 : vector<1x128xf32> to vector<32x128xf32>
    %29 = arith.mulf %21, %28 : vector<32x128xf32>
    %c0_14 = arith.constant 0 : index
    %c0_15 = arith.constant 0 : index
    %30 = vector.load %arg5[%c0_14, %c0_15] : memref<32x128xf32, #tpu.memory_space<vmem>>, vector<32x128xf32>
    tpu.vector_store %arg5[%c0_14, %c0_15], %29 {strides = array<i32>} : memref<32x128xf32, #tpu.memory_space<vmem>>, vector<32x128xf32>,
    return
  }
  func.func @transform_0(%arg0: i32) -> (i32, i32) {
    %c0_i32 = arith.constant 0 : i32
    %c0_i32_0 = arith.constant 0 : i32
    return %c0_i32, %arg0 : i32, i32
  }
  func.func @transform_1(%arg0: i32) -> (i32, i32) {
    %c0_i32 = arith.constant 0 : i32
    %c0_i32_0 = arith.constant 0 : i32
    %c0_i32_1 = arith.constant 0 : i32
    return %c0_i32, %c0_i32_0 : i32, i32
  }
  func.func @transform_2(%arg0: i32) -> (i32, i32) {
    %c0_i32 = arith.constant 0 : i32
    %c0_i32_0 = arith.constant 0 : i32
    %c0_i32_1 = arith.constant 0 : i32
    return %c0_i32, %c0_i32_0 : i32, i32
  }
  func.func @transform_3(%arg0: i32) -> (i32, i32) {
    %c0_i32 = arith.constant 0 : i32
    %c0_i32_0 = arith.constant 0 : i32
    %c0_i32_1 = arith.constant 0 : i32
    return %c0_i32, %c0_i32_0 : i32, i32
  }
  func.func @transform_4(%arg0: i32) -> (i32, i32) {
    %c0_i32 = arith.constant 0 : i32
    %c0_i32_0 = arith.constant 0 : i32
    return %c0_i32, %arg0 : i32, i32
  }
}

</mosaic_0001>

<llo_original>
// kernel: tpu_custom_call.1
$region0: #{tpu_custom_call.1}
  #allocation0 [shape = 'u32[]', space=smem, size = 0x4, offset = 0x4, fixed_abs, tag = 'smem constant byte address 0x4 - core index']
  #allocation1 [shape = 'u32[144,128]{1,0:T(1,128)}', space=vmem, size = 0x12000, scoped, tag = 'internal scratch']
  %s0 = inlined_call_operand.vmem [shape: f32[32,200], index: 0, kind: input, shape index: {}]
  %s1 = inlined_call_operand.vmem [shape: f32[128,32], index: 1, kind: input, shape index: {}]
  %s2 = inlined_call_operand.vmem [shape: f32[32,128], index: 2, kind: input, shape index: {}]
  %s3 = inlined_call_operand.vmem [shape: f32[32,1], index: 3, kind: input, shape index: {}]
  %s4 = inlined_call_operand.hbm [shape: f32[32,200], index: 4, kind: output, shape index: {}]
  %s5 = sld [smem:[#allocation0]]
  $region87: #{tpu_custom_call.1} parent=0
    _
  %s7 = ssub.s32 1, %s5
  %s8 = scalar_select 0, %s7, %s5
  $region1: #{tpu_custom_call.1} parent=0
    #allocation2 [shape = 'u8[32768]{0}', space=vmem, size = 0x8000, scoped, tag = 'input window, operand 0']
    #allocation3 [shape = 'u8[32768]{0}', space=vmem, size = 0x8000, scoped, tag = 'output window, operand 0']
    #allocation4 [shape = 's32[2]{0}', space=sflag, size = 0x8, scoped, tag = 'scoped memory for tpu_custom_call.1']
    %9 = vsyncpa [#allocation4], 0
    %s10 = scalar_lea.sflag [#allocation4], 1
    %11 = vsyncpa %s10, 0
    loop: start=0, step=1, limit=4
    $region2: #{tpu_custom_call.1} parent=1 // loop_pre_header
      _
    $region3: #{tpu_custom_call.1} parent=1 // loop_header
      %s13 = sphi 0, %s17
      %p14 = scmp.ge.s32.totalorder %s13, 4
      %s23 = sphi 0, %s25
      %s26 = sphi 0, %s23
      %s27 = sphi 0, %s26
      %s43 = sphi 0, %s27
      %s47 = sphi 0, %s47
      %s49 = sphi 0, %s47
      %s50 = sphi 0, %s49
      %s64 = sphi 0, %s50
      %s68 = sphi 0, %s68
      %s70 = sphi 0, %s68
      %s71 = sphi 0, %s70
      %s85 = sphi 0, %s71
      %s89 = sphi 0, %s89
      %s91 = sphi 0, %s89
      %s92 = sphi 0, %s91
      %s106 = sphi 0, %s92
      %s112 = sphi 0, %s114
      %s115 = sphi 0, %s112
      %s116 = sphi 0, %s115
      %s132 = sphi 0, %s116
    $region4: #{tpu_custom_call.1} parent=1 // loop_header_branch
      %16 = sbr.rel (%p14) target = $region8
    $region5: #{tpu_custom_call.1} parent=1 // loop_body
      %s18 = ssub.s32 %s13, 1
      %s19 = ssub.s32 %s13, 2
      %s20 = sadd.s32 %s13, 1
      %s21 = ssub.s32 %s13, %s20
      %p22 = scmp.eq.s32.totalorder %s21, 0
      %s24 = sadd.s32 %s23, 1
      %s25 = scalar_select %p22, %s23, %s24
      %p28 = pneg %p22
      %p29 = scmp.eq.s32.totalorder %s13, 1
      %p30 = por %p28, %p29
      %p31 = scmp.ne.s32.totalorder %s23, %s26
      %p32 = scmp.eq.s32.totalorder %s13, 0
      %p33 = por %p31, %p32
      %p34 = scmp.ne.s32.totalorder %s23, %s26
      %p35 = scmp.eq.s32.totalorder %s18, 1
      %p36 = por %p34, %p35
      %p37 = scmp.ne.s32.totalorder %s26, %s27
      %p38 = scmp.eq.s32.totalorder %s18, 0
      %p39 = por %p37, %p38
      %p40 = scmp.ne.s32.totalorder %s26, %s27
      %p41 = scmp.eq.s32.totalorder %s19, 1
      %p42 = por %p40, %p41
      %p44 = scmp.ne.s32.totalorder %s27, %s43
      %p45 = scmp.eq.s32.totalorder %s19, 0
      %p46 = por %p44, %p45
      %s48 = sadd.s32 %s47, 1
      %p51 = scmp.eq.s32.totalorder %s13, 1
      %p52 = scmp.ne.s32.totalorder %s47, %s49
      %p53 = scmp.eq.s32.totalorder %s13, 0
      %p54 = por %p52, %p53
      %p55 = scmp.ne.s32.totalorder %s47, %s49
      %p56 = scmp.eq.s32.totalorder %s18, 1
      %p57 = por %p55, %p56
      %p58 = scmp.ne.s32.totalorder %s49, %s50
      %p59 = scmp.eq.s32.totalorder %s18, 0
      %p60 = por %p58, %p59
      %p61 = scmp.ne.s32.totalorder %s49, %s50
      %p62 = scmp.eq.s32.totalorder %s19, 1
      %p63 = por %p61, %p62
      %p65 = scmp.ne.s32.totalorder %s50, %s64
      %p66 = scmp.eq.s32.totalorder %s19, 0
      %p67 = por %p65, %p66
      %s69 = sadd.s32 %s68, 1
      %p72 = scmp.eq.s32.totalorder %s13, 1
      %p73 = scmp.ne.s32.totalorder %s68, %s70
      %p74 = scmp.eq.s32.totalorder %s13, 0
      %p75 = por %p73, %p74
      %p76 = scmp.ne.s32.totalorder %s68, %s70
      %p77 = scmp.eq.s32.totalorder %s18, 1
      %p78 = por %p76, %p77
      %p79 = scmp.ne.s32.totalorder %s70, %s71
      %p80 = scmp.eq.s32.totalorder %s18, 0
      %p81 = por %p79, %p80
      %p82 = scmp.ne.s32.totalorder %s70, %s71
      %p83 = scmp.eq.s32.totalorder %s19, 1
      %p84 = por %p82, %p83
      %p86 = scmp.ne.s32.totalorder %s71, %s85
      %p87 = scmp.eq.s32.totalorder %s19, 0
      %p88 = por %p86, %p87
      %s90 = sadd.s32 %s89, 1
      %p93 = scmp.eq.s32.totalorder %s13, 1
      %p94 = scmp.ne.s32.totalorder %s89, %s91
      %p95 = scmp.eq.s32.totalorder %s13, 0
      %p96 = por %p94, %p95
      %p97 = scmp.ne.s32.totalorder %s89, %s91
      %p98 = scmp.eq.s32.totalorder %s18, 1
      %p99 = por %p97, %p98
      %p100 = scmp.ne.s32.totalorder %s91, %s92
      %p101 = scmp.eq.s32.totalorder %s18, 0
      %p102 = por %p100, %p101
      %p103 = scmp.ne.s32.totalorder %s91, %s92
      %p104 = scmp.eq.s32.totalorder %s19, 1
      %p105 = por %p103, %p104
      %p107 = scmp.ne.s32.totalorder %s92, %s106
      %p108 = scmp.eq.s32.totalorder %s19, 0
      %p109 = por %p107, %p108
      %s110 = ssub.s32 %s13, %s20
      %p111 = scmp.eq.s32.totalorder %s110, 0
      %s113 = sadd.s32 %s112, 1
      %s114 = scalar_select %p111, %s112, %s113
      %p117 = pneg %p111
      %p118 = scmp.eq.s32.totalorder %s13, 1
      %p119 = por %p117, %p118
      %p120 = scmp.ne.s32.totalorder %s112, %s115
      %p121 = scmp.eq.s32.totalorder %s13, 0
      %p122 = por %p120, %p121
      %p123 = scmp.ne.s32.totalorder %s112, %s115
      %p124 = scmp.eq.s32.totalorder %s18, 1
      %p125 = por %p123, %p124
      %p126 = scmp.ne.s32.totalorder %s115, %s116
      %p127 = scmp.eq.s32.totalorder %s18, 0
      %p128 = por %p126, %p127
      %p129 = scmp.ne.s32.totalorder %s115, %s116
      %p130 = scmp.eq.s32.totalorder %s19, 1
      %p131 = por %p129, %p130
      %p133 = scmp.ne.s32.totalorder %s116, %s132
      %p134 = scmp.eq.s32.totalorder %s19, 0
      %p135 = por %p133, %p134
      %p136 = scmp.le.s32.totalorder 1, %s13
      %p137 = scmp.lt.s32.totalorder %s13, 3
      %p138 = pnand %p136, %p137
      %p139 = pneg %p138
      // Predicated region
      $region9: #{tpu_custom_call.1} parent=5 // pred_check
        _
      $region10: #{tpu_custom_call.1} parent=5 // pred_check_branch
        %141 = sbr.rel (%p138) target = $region12
      $region11: #{tpu_custom_call.1} parent=5 // pred_region
        %s142 = ssub.s32 %s13, 1
        // Predicated region
        $region13: #{tpu_custom_call.1} parent=11 // pred_check
          %p143 = pneg %p60
        $region14: #{tpu_custom_call.1} parent=11 // pred_check_branch
          %145 = sbr.rel (%p143) target = $region16
        $region15: #{tpu_custom_call.1} parent=11 // pred_region
          _
        $region16: #{tpu_custom_call.1} parent=11 // pred_fallthru
          _
        // Predicated region
        $region17: #{tpu_custom_call.1} parent=11 // pred_check
          %p146 = pneg %p81
        $region18: #{tpu_custom_call.1} parent=11 // pred_check_branch
          %148 = sbr.rel (%p146) target = $region20
        $region19: #{tpu_custom_call.1} parent=11 // pred_region
          _
        $region20: #{tpu_custom_call.1} parent=11 // pred_fallthru
          _
        // Predicated region
        $region21: #{tpu_custom_call.1} parent=11 // pred_check
          %p149 = pneg %p102
        $region22: #{tpu_custom_call.1} parent=11 // pred_check_branch
          %151 = sbr.rel (%p149) target = $region24
        $region23: #{tpu_custom_call.1} parent=11 // pred_region
          _
        $region24: #{tpu_custom_call.1} parent=11 // pred_fallthru
          _
      $region12: #{tpu_custom_call.1} parent=5 // pred_fallthru
        _
      %p152 = scmp.lt.s32.totalorder %s13, 2
      // Predicated region
      $region25: #{tpu_custom_call.1} parent=5 // pred_check
        %p153 = pneg %p152
      $region26: #{tpu_custom_call.1} parent=5 // pred_check_branch
        %155 = sbr.rel (%p153) target = $region28
      $region27: #{tpu_custom_call.1} parent=5 // pred_region
        // Predicated region
        $region29: #{tpu_custom_call.1} parent=27 // pred_check
          %p156 = pneg %p33
        $region30: #{tpu_custom_call.1} parent=27 // pred_check_branch
          %158 = sbr.rel (%p156) target = $region32
        $region31: #{tpu_custom_call.1} parent=27 // pred_region
          %s159 = sand.u32 %s23, 1
          %s160 = sand.u32 %s23, 1
          %s161 = smul.addr %s160, 32
          %s162 = scalar_lea.vmem [#allocation2], %s161
          %s163 = smul.addr %s13, 8
          %s164 = scalar_lea.vmem %s0, %s163
          // Predicated region
          $region33: #{tpu_custom_call.1} parent=31 // pred_check
            _
          $region34: #{tpu_custom_call.1} parent=31 // pred_check_branch
            %166 = sbr.rel (0) target = $region36
          $region35: #{tpu_custom_call.1} parent=31 // pred_region
            // Predicated region
            $region37: #{tpu_custom_call.1} parent=35 // pred_check
              _
            $region38: #{tpu_custom_call.1} parent=35 // pred_check_branch
              %168 = sbr.rel (0) target = $region40
            $region39: #{tpu_custom_call.1} parent=35 // pred_region
              // Predicated region
              $region52: #{tpu_custom_call.1} parent=39 // pred_check
                _
              $region53: #{tpu_custom_call.1} parent=39 // pred_check_branch
                %190 = sbr.rel (0) target = $region55
              $region54: #{tpu_custom_call.1} parent=39 // pred_region
                loop: start=0, step=1, limit=1
                $region56: #{tpu_custom_call.1} parent=54 // loop_pre_header
                  _
                $region57: #{tpu_custom_call.1} parent=54 // loop_header
                  %s192 = sphi 0, %s196
                  %p193 = scmp.ge.s32.totalorder %s192, 1
                  %s197 = sphi %s164, %s164
                  %s198 = sphi %s162, %s162
                $region58: #{tpu_custom_call.1} parent=54 // loop_header_branch
                  %195 = sbr.rel (%p193) target = $region62
                $region59: #{tpu_custom_call.1} parent=54 // loop_body
                  %v199 = vld [vmem:[%s197] sm:$0xff]
                  %200 = vst [vmem:[%s198] sm:$0xff] %v199
                  %v201 = vld [vmem:[%s197 + $0x10] sm:$0xff]
                  %202 = vst [vmem:[%s198 + $0x8] sm:$0xff] %v201
                  %v203 = vld [vmem:[%s197 + $0x20] sm:$0xff]
                  %204 = vst [vmem:[%s198 + $0x10] sm:$0xff] %v203
                  %v205 = vld [vmem:[%s197 + $0x30] sm:$0xff]
                  %206 = vst [vmem:[%s198 + $0x18] sm:$0xff] %v205
                $region60: #{tpu_custom_call.1} parent=54 // loop_footer
                  %s196 = sadd.s32 1, %s192
                $region61: #{tpu_custom_call.1} parent=54 // loop_footer_branch
                  %191 = sbr.rel target = $region57
                $region62: #{tpu_custom_call.1} parent=54 // loop_exit
                  _
              $region55: #{tpu_custom_call.1} parent=39 // pred_fallthru
                _
              // Predicated region
              $region63: #{tpu_custom_call.1} parent=39 // pred_check
                _
              $region64: #{tpu_custom_call.1} parent=39 // pred_check_branch
                %208 = sbr.rel target = $region66
              $region65: #{tpu_custom_call.1} parent=39 // pred_region
                _
              $region66: #{tpu_custom_call.1} parent=39 // pred_fallthru
                _
            $region40: #{tpu_custom_call.1} parent=35 // pred_fallthru
              _
            // Predicated region
            $region41: #{tpu_custom_call.1} parent=35 // pred_check
              _
            $region42: #{tpu_custom_call.1} parent=35 // pred_check_branch
              %170 = sbr.rel target = $region44
            $region43: #{tpu_custom_call.1} parent=35 // pred_region
              %s172 = ssub.s32 256, 1
              loop: start=0, step=1, limit=1
              $region45: #{tpu_custom_call.1} parent=43 // loop_pre_header
                _
              $region46: #{tpu_custom_call.1} parent=43 // loop_header
                %s174 = sphi 0, %s178
                %p175 = scmp.ge.s32.totalorder %s174, 1
                %s179 = sphi %s164, %s164
                %s180 = sphi %s162, %s162
              $region47: #{tpu_custom_call.1} parent=43 // loop_header_branch
                %177 = sbr.rel (%p175) target = $region51
              $region48: #{tpu_custom_call.1} parent=43 // loop_body
                %v181 = vld [vmem:[%s179] sm:%s172]
                %182 = vst [vmem:[%s180] sm:%s172] %v181
                %v183 = vld [vmem:[%s179 + $0x10] sm:%s172]
                %184 = vst [vmem:[%s180 + $0x8] sm:%s172] %v183
                %v185 = vld [vmem:[%s179 + $0x20] sm:%s172]
                %186 = vst [vmem:[%s180 + $0x10] sm:%s172] %v185
                %v187 = vld [vmem:[%s179 + $0x30] sm:%s172]
                %188 = vst [vmem:[%s180 + $0x18] sm:%s172] %v187
              $region49: #{tpu_custom_call.1} parent=43 // loop_footer
                %s178 = sadd.s32 1, %s174
              $region50: #{tpu_custom_call.1} parent=43 // loop_footer_branch
                %173 = sbr.rel target = $region46
              $region51: #{tpu_custom_call.1} parent=43 // loop_exit
                _
            $region44: #{tpu_custom_call.1} parent=35 // pred_fallthru
              _
          $region36: #{tpu_custom_call.1} parent=31 // pred_fallthru
            _
          %209 = vnop
        $region32: #{tpu_custom_call.1} parent=27 // pred_fallthru
          _
      $region28: #{tpu_custom_call.1} parent=5 // pred_fallthru
        _
      %p210 = scmp.le.s32.totalorder 1, %s13
      %p211 = scmp.lt.s32.totalorder %s13, 3
      %p212 = pnand %p210, %p211
      %p213 = pneg %p212
      // Predicated region
      $region67: #{tpu_custom_call.1} parent=5 // pred_check
        _
      $region68: #{tpu_custom_call.1} parent=5 // pred_check_branch
        %215 = sbr.rel (%p212) target = $region70
      $region69: #{tpu_custom_call.1} parent=5 // pred_region
        %s216 = ssub.s32 %s13, 1
        %s217 = sand.u32 %s26, 1
        %s218 = sand.u32 %s26, 1
        %s219 = smul.addr %s218, 32
        %s220 = scalar_lea.vmem [#allocation2], %s219
        // Predicated region
        $region71: #{tpu_custom_call.1} parent=69 // pred_check
          %p221 = pneg %p39
        $region72: #{tpu_custom_call.1} parent=69 // pred_check_branch
          %223 = sbr.rel (%p221) target = $region74
        $region73: #{tpu_custom_call.1} parent=69 // pred_region
          _
        $region74: #{tpu_custom_call.1} parent=69 // pred_fallthru
          _
        %s224 = sand.u32 %s26, 1
        %s225 = sand.u32 %s26, 1
        %s226 = smul.addr %s225, 32
        %s227 = scalar_lea.vmem [#allocation2], %s226
        %p228 = pneg %p39
        %p229 = pneg %p36
        %p230 = pneg %p60
        %p231 = pneg %p57
        %p232 = pneg %p81
        %p233 = pneg %p78
        %p234 = pneg %p102
        %p235 = pneg %p99
        %p236 = pneg %p128
        %p237 = pneg %p125
        %s238 = sand.u32 %s115, 1
        %s239 = scalar_lea.sflag [#allocation4], %s238
        %s240 = sand.u32 %s115, 1
        %s241 = smul.addr %s240, 32
        %s242 = scalar_lea.vmem [#allocation3], %s241
        %v243 = vld [vmem:[%s220] sm:$0xff]
        %v244 = vld [vmem:[%s220 + $0x8] sm:$0xff]
        %v245 = vld [vmem:[%s220 + $0x10] sm:$0xff]
        %v246 = vld [vmem:[%s220 + $0x18] sm:$0xff]
        %v247 = vld [vmem:[%s1] sm:$0xff]
        %v248 = vld [vmem:[%s1 + $0x8] sm:$0xff]
        %v249 = vld [vmem:[%s1 + $0x10] sm:$0xff]
        %v250 = vld [vmem:[%s1 + $0x18] sm:$0xff]
        %v251 = vld [vmem:[%s1 + $0x20] sm:$0xff]
        %v252 = vld [vmem:[%s1 + $0x28] sm:$0xff]
        %v253 = vld [vmem:[%s1 + $0x30] sm:$0xff]
        %v254 = vld [vmem:[%s1 + $0x38] sm:$0xff]
        %v255 = vld [vmem:[%s1 + $0x40] sm:$0xff]
        %v256 = vld [vmem:[%s1 + $0x48] sm:$0xff]
        %v257 = vld [vmem:[%s1 + $0x50] sm:$0xff]
        %v258 = vld [vmem:[%s1 + $0x58] sm:$0xff]
        %v259 = vld [vmem:[%s1 + $0x60] sm:$0xff]
        %v260 = vld [vmem:[%s1 + $0x68] sm:$0xff]
        %v261 = vld [vmem:[%s1 + $0x70] sm:$0xff]
        %v262 = vld [vmem:[%s1 + $0x78] sm:$0xff]
        %vm263 = vcmask 261120
        %v265 = vsel %vm263, %v247, 0
        %v268 = vsel %vm263, %v248, 0
        %v271 = vsel %vm263, %v249, 0
        %v274 = vsel %vm263, %v250, 0
        %v277 = vsel %vm263, %v251, 0
        %v280 = vsel %vm263, %v252, 0
        %v283 = vsel %vm263, %v253, 0
        %v286 = vsel %vm263, %v254, 0
        %v289 = vsel %vm263, %v255, 0
        %v292 = vsel %vm263, %v256, 0
        %v295 = vsel %vm263, %v257, 0
        %v298 = vsel %vm263, %v258, 0
        %v301 = vsel %vm263, %v259, 0
        %v304 = vsel %vm263, %v260, 0
        %v307 = vsel %vm263, %v261, 0
        %v310 = vsel %vm263, %v262, 0
        %312 = vmatprep.subr.mxu0 0.0
        %313 = vmatpush1.msra.mxu0 0.0
        %314 = vmatprep.subr.mxu0 0.0
        %315 = vmatpush1.msra.mxu0 0.0
        %316 = vmatprep.subr.mxu0 0.0
        %317 = vmatpush1.msra.mxu0 0.0
        %318 = vmatprep.subr.mxu0 0.0
        %319 = vmatpush1.msra.mxu0 0.0
        %320 = vmatprep.subr.mxu0 0.0
        %321 = vmatpush1.msra.mxu0 0.0
        %322 = vmatprep.subr.mxu0 0.0
        %323 = vmatpush1.msra.mxu0 0.0
        %324 = vmatprep.subr.mxu0 0.0
        %325 = vmatpush1.msra.mxu0 0.0
        %326 = vmatprep.subr.mxu0 0.0
        %327 = vmatpush1.msra.mxu0 0.0
        %328 = vmatprep.subr.mxu0 0.0
        %329 = vmatpush1.msra.mxu0 0.0
        %330 = vmatprep.subr.mxu0 0.0
        %331 = vmatpush1.msra.mxu0 0.0
        %332 = vmatprep.subr.mxu0 0.0
        %333 = vmatpush1.msra.mxu0 0.0
        %334 = vmatprep.subr.mxu0 0.0
        %335 = vmatpush1.msra.mxu0 0.0
        %336 = vmatprep.subr.mxu0 0.0
        %337 = vmatpush1.msra.mxu0 %v246
        %338 = vmatprep.subr.mxu0 0.0
        %339 = vmatpush1.msra.mxu0 %v245
        %340 = vmatprep.subr.mxu0 0.0
        %341 = vmatpush1.msra.mxu0 %v244
        %342 = vmatprep.subr.mxu0 0.0
        %343 = vmatpush1.msra.mxu0 %v243
        %344 = vmatprep.subr.mxu0 0.0
        %345 = vmatpush2.msra.mxu0 0.0
        %346 = vmatprep.subr.mxu0 0.0
        %347 = vmatpush2.msra.mxu0 0.0
        %348 = vmatprep.subr.mxu0 0.0
        %349 = vmatpush2.msra.mxu0 0.0
        %350 = vmatprep.subr.mxu0 0.0
        %351 = vmatpush2.msra.mxu0 0.0
        %352 = vmatprep.subr.mxu0 0.0
        %353 = vmatpush2.msra.mxu0 0.0
        %354 = vmatprep.subr.mxu0 0.0
        %355 = vmatpush2.msra.mxu0 0.0
        %356 = vmatprep.subr.mxu0 0.0
        %357 = vmatpush2.msra.mxu0 0.0
        %358 = vmatprep.subr.mxu0 0.0
        %359 = vmatpush2.msra.mxu0 0.0
        %360 = vmatprep.subr.mxu0 0.0
        %361 = vmatpush2.msra.mxu0 0.0
        %362 = vmatprep.subr.mxu0 0.0
        %363 = vmatpush2.msra.mxu0 0.0
        %364 = vmatprep.subr.mxu0 0.0
        %365 = vmatpush2.msra.mxu0 0.0
        %366 = vmatprep.subr.mxu0 0.0
        %367 = vmatpush2.msra.mxu0 0.0
        %368 = vmatprep.subr.mxu0 0.0
        %369 = vmatpush2.msra.mxu0 0.0
        %370 = vmatprep.subr.mxu0 0.0
        %371 = vmatpush2.msra.mxu0 0.0
        %372 = vmatprep.subr.mxu0 0.0
        %373 = vmatpush2.msra.mxu0 0.0
        %374 = vmatprep.subr.mxu0 0.0
        %375 = vmatpush2.msra.mxu0 0.0
        %376 = vmatprep.mubr.f32.mxu0 0.0
        %377 = vmatmul.mubr.f32.gmra.mxu0 %v265
        %v378 = vpop.f32.mrf.mxu0
        %v379 = vadd.f32 0.0, %v378
        %v380 = vpop.f32.mrf.mxu0
        %381 = vmatprep.mubr.f32.mxu0 0.0
        %382 = vmatmul.mubr.f32.gmra.mxu0 %v268
        %v383 = vpop.f32.mrf.mxu0
        %v384 = vadd.f32 0.0, %v383
        %v385 = vpop.f32.mrf.mxu0
        %386 = vmatprep.mubr.f32.mxu0 0.0
        %387 = vmatmul.mubr.f32.gmra.mxu0 %v271
        %v388 = vpop.f32.mrf.mxu0
        %v389 = vadd.f32 0.0, %v388
        %v390 = vpop.f32.mrf.mxu0
        %391 = vmatprep.mubr.f32.mxu0 0.0
        %392 = vmatmul.mubr.f32.gmra.mxu0 %v274
        %v393 = vpop.f32.mrf.mxu0
        %v394 = vadd.f32 0.0, %v393
        %v395 = vpop.f32.mrf.mxu0
        %396 = vmatprep.mubr.f32.mxu0 0.0
        %397 = vmatmul.mubr.f32.gmra.mxu0 %v277
        %v398 = vpop.f32.mrf.mxu0
        %v399 = vadd.f32 0.0, %v398
        %v400 = vpop.f32.mrf.mxu0
        %401 = vmatprep.mubr.f32.mxu0 0.0
        %402 = vmatmul.mubr.f32.gmra.mxu0 %v280
        %v403 = vpop.f32.mrf.mxu0
        %v404 = vadd.f32 0.0, %v403
        %v405 = vpop.f32.mrf.mxu0
        %406 = vmatprep.mubr.f32.mxu0 0.0
        %407 = vmatmul.mubr.f32.gmra.mxu0 %v283
        %v408 = vpop.f32.mrf.mxu0
        %v409 = vadd.f32 0.0, %v408
        %v410 = vpop.f32.mrf.mxu0
        %411 = vmatprep.mubr.f32.mxu0 0.0
        %412 = vmatmul.mubr.f32.gmra.mxu0 %v286
        %v413 = vpop.f32.mrf.mxu0
        %v414 = vadd.f32 0.0, %v413
        %v415 = vpop.f32.mrf.mxu0
        %416 = vmatprep.mubr.f32.mxu0 0.0
        %417 = vmatmul.mubr.f32.gmra.mxu0 %v289
        %v418 = vpop.f32.mrf.mxu0
        %v419 = vadd.f32 0.0, %v418
        %v420 = vpop.f32.mrf.mxu0
        %421 = vmatprep.mubr.f32.mxu0 0.0
        %422 = vmatmul.mubr.f32.gmra.mxu0 %v292
        %v423 = vpop.f32.mrf.mxu0
        %v424 = vadd.f32 0.0, %v423
        %v425 = vpop.f32.mrf.mxu0
        %426 = vmatprep.mubr.f32.mxu0 0.0
        %427 = vmatmul.mubr.f32.gmra.mxu0 %v295
        %v428 = vpop.f32.mrf.mxu0
        %v429 = vadd.f32 0.0, %v428
        %v430 = vpop.f32.mrf.mxu0
        %431 = vmatprep.mubr.f32.mxu0 0.0
        %432 = vmatmul.mubr.f32.gmra.mxu0 %v298
        %v433 = vpop.f32.mrf.mxu0
        %v434 = vadd.f32 0.0, %v433
        %v435 = vpop.f32.mrf.mxu0
        %436 = vmatprep.mubr.f32.mxu0 0.0
        %437 = vmatmul.mubr.f32.gmra.mxu0 %v301
        %v438 = vpop.f32.mrf.mxu0
        %v439 = vadd.f32 0.0, %v438
        %v440 = vpop.f32.mrf.mxu0
        %441 = vmatprep.mubr.f32.mxu0 0.0
        %442 = vmatmul.mubr.f32.gmra.mxu0 %v304
        %v443 = vpop.f32.mrf.mxu0
        %v444 = vadd.f32 0.0, %v443
        %v445 = vpop.f32.mrf.mxu0
        %446 = vmatprep.mubr.f32.mxu0 0.0
        %447 = vmatmul.mubr.f32.gmra.mxu0 %v307
        %v448 = vpop.f32.mrf.mxu0
        %v449 = vadd.f32 0.0, %v448
        %v450 = vpop.f32.mrf.mxu0
        %451 = vmatprep.mubr.f32.mxu0 0.0
        %452 = vmatmul.mubr.f32.gmra.mxu0 %v310
        %v453 = vpop.f32.mrf.mxu0
        %v454 = vadd.f32 0.0, %v453
        %v455 = vpop.f32.mrf.mxu0
        %456 = vdwg.mxu0
        %v457 = vmax.f32 %v379, 0.0
        %v458 = vmax.f32 %v384, 0.0
        %v459 = vmax.f32 %v389, 0.0
        %v460 = vmax.f32 %v394, 0.0
        %v461 = vmax.f32 %v399, 0.0
        %v462 = vmax.f32 %v404, 0.0
        %v463 = vmax.f32 %v409, 0.0
        %v464 = vmax.f32 %v414, 0.0
        %v465 = vmax.f32 %v419, 0.0
        %v466 = vmax.f32 %v424, 0.0
        %v467 = vmax.f32 %v429, 0.0
        %v468 = vmax.f32 %v434, 0.0
        %v469 = vmax.f32 %v439, 0.0
        %v470 = vmax.f32 %v444, 0.0
        %v471 = vmax.f32 %v449, 0.0
        %v472 = vmax.f32 %v454, 0.0
        %v473 = vadd.f32 %v457, 1e-08
        %v474 = vadd.f32 %v458, 1e-08
        %v475 = vadd.f32 %v459, 1e-08
        %v476 = vadd.f32 %v460, 1e-08
        %v477 = vadd.f32 %v461, 1e-08
        %v478 = vadd.f32 %v462, 1e-08
        %v479 = vadd.f32 %v463, 1e-08
        %v480 = vadd.f32 %v464, 1e-08
        %v481 = vadd.f32 %v465, 1e-08
        %v482 = vadd.f32 %v466, 1e-08
        %v483 = vadd.f32 %v467, 1e-08
        %v484 = vadd.f32 %v468, 1e-08
        %v485 = vadd.f32 %v469, 1e-08
        %v486 = vadd.f32 %v470, 1e-08
        %v487 = vadd.f32 %v471, 1e-08
        %v488 = vadd.f32 %v472, 1e-08
        %v489 = vld [vmem:[%s2] sm:$0xff]
        %v490 = vld [vmem:[%s2 + $0x8] sm:$0xff]
        %v491 = vld [vmem:[%s2 + $0x10] sm:$0xff]
        %v492 = vld [vmem:[%s2 + $0x18] sm:$0xff]
        %493 = vmatprep.subr.mxu0 0.0
        %494 = vmatpush1.msra.mxu0 %v488
        %495 = vmatprep.subr.mxu0 0.0
        %496 = vmatpush1.msra.mxu0 %v487
        %497 = vmatprep.subr.mxu0 0.0
        %498 = vmatpush1.msra.mxu0 %v486
        %499 = vmatprep.subr.mxu0 0.0
        %500 = vmatpush1.msra.mxu0 %v485
        %501 = vmatprep.subr.mxu0 0.0
        %502 = vmatpush1.msra.mxu0 %v484
        %503 = vmatprep.subr.mxu0 0.0
        %504 = vmatpush1.msra.mxu0 %v483
        %505 = vmatprep.subr.mxu0 0.0
        %506 = vmatpush1.msra.mxu0 %v482
        %507 = vmatprep.subr.mxu0 0.0
        %508 = vmatpush1.msra.mxu0 %v481
        %509 = vmatprep.subr.mxu0 0.0
        %510 = vmatpush1.msra.mxu0 %v480
        %511 = vmatprep.subr.mxu0 0.0
        %512 = vmatpush1.msra.mxu0 %v479
        %513 = vmatprep.subr.mxu0 0.0
        %514 = vmatpush1.msra.mxu0 %v478
        %515 = vmatprep.subr.mxu0 0.0
        %516 = vmatpush1.msra.mxu0 %v477
        %517 = vmatprep.subr.mxu0 0.0
        %518 = vmatpush1.msra.mxu0 %v476
        %519 = vmatprep.subr.mxu0 0.0
        %520 = vmatpush1.msra.mxu0 %v475
        %521 = vmatprep.subr.mxu0 0.0
        %522 = vmatpush1.msra.mxu0 %v474
        %523 = vmatprep.subr.mxu0 0.0
        %524 = vmatpush1.msra.mxu0 %v473
        %525 = vmatprep.subr.mxu0 0.0
        %526 = vmatpush2.msra.mxu0 0.0
        %527 = vmatprep.subr.mxu0 0.0
        %528 = vmatpush2.msra.mxu0 0.0
        %529 = vmatprep.subr.mxu0 0.0
        %530 = vmatpush2.msra.mxu0 0.0
        %531 = vmatprep.subr.mxu0 0.0
        %532 = vmatpush2.msra.mxu0 0.0
        %533 = vmatprep.subr.mxu0 0.0
        %534 = vmatpush2.msra.mxu0 0.0
        %535 = vmatprep.subr.mxu0 0.0
        %536 = vmatpush2.msra.mxu0 0.0
        %537 = vmatprep.subr.mxu0 0.0
        %538 = vmatpush2.msra.mxu0 0.0
        %539 = vmatprep.subr.mxu0 0.0
        %540 = vmatpush2.msra.mxu0 0.0
        %541 = vmatprep.subr.mxu0 0.0
        %542 = vmatpush2.msra.mxu0 0.0
        %543 = vmatprep.subr.mxu0 0.0
        %544 = vmatpush2.msra.mxu0 0.0
        %545 = vmatprep.subr.mxu0 0.0
        %546 = vmatpush2.msra.mxu0 0.0
        %547 = vmatprep.subr.mxu0 0.0
        %548 = vmatpush2.msra.mxu0 0.0
        %549 = vmatprep.subr.mxu0 0.0
        %550 = vmatpush2.msra.mxu0 0.0
        %551 = vmatprep.subr.mxu0 0.0
        %552 = vmatpush2.msra.mxu0 0.0
        %553 = vmatprep.subr.mxu0 0.0
        %554 = vmatpush2.msra.mxu0 0.0
        %555 = vmatprep.subr.mxu0 0.0
        %556 = vmatpush2.msra.mxu0 0.0
        %557 = vmatprep.mubr.f32.mxu0 0.0
        %558 = vmatmul.mubr.f32.gmra.mxu0 %v489
        %v559 = vpop.f32.mrf.mxu0
        %v560 = vadd.f32 0.0, %v559
        %v561 = vpop.f32.mrf.mxu0
        %562 = vmatprep.mubr.f32.mxu0 0.0
        %563 = vmatmul.mubr.f32.gmra.mxu0 %v490
        %v564 = vpop.f32.mrf.mxu0
        %v565 = vadd.f32 0.0, %v564
        %v566 = vpop.f32.mrf.mxu0
        %567 = vmatprep.mubr.f32.mxu0 0.0
        %568 = vmatmul.mubr.f32.gmra.mxu0 %v491
        %v569 = vpop.f32.mrf.mxu0
        %v570 = vadd.f32 0.0, %v569
        %v571 = vpop.f32.mrf.mxu0
        %572 = vmatprep.mubr.f32.mxu0 0.0
        %573 = vmatmul.mubr.f32.gmra.mxu0 %v492
        %v574 = vpop.f32.mrf.mxu0
        %v575 = vadd.f32 0.0, %v574
        %v576 = vpop.f32.mrf.mxu0
        %577 = vdwg.mxu0
        %v578 = vmul.f32 %v560, %v560
        %v579 = vmul.f32 %v565, %v565
        %v580 = vmul.f32 %v570, %v570
        %v581 = vmul.f32 %v575, %v575
        %v582 = vadd.f32 %v578, %v579
        %v583 = vadd.f32 %v582, %v580
        %v584 = vadd.f32 %v583, %v581
        %v585 = vrot.slane %v584, 4
        %v586 = vadd.f32 %v584, %v585
        %v587 = vrot.slane %v586, 2
        %v588 = vadd.f32 %v586, %v587
        %v589 = vrot.slane %v588, 1
        %v590 = vadd.f32 %v588, %v589
        %v591 = vmax.f32 %v590, 1e-24
        %v592 = vrsqrt.pop %v591
        %v593 = vmul.f32 %v560, %v592
        %v594 = vmul.f32 %v565, %v592
        %v595 = vmul.f32 %v570, %v592
        %v596 = vmul.f32 %v575, %v592
        %v597 = vld [vmem:[%s3] sm:$0xff]
        %v598 = vld [vmem:[%s3 + $0x8] sm:$0xff]
        %v599 = vld [vmem:[%s3 + $0x10] sm:$0xff]
        %v600 = vld [vmem:[%s3 + $0x18] sm:$0xff]
        %v601 = vsub.f32 %v593, %v243
        %v602 = vsub.f32 %v594, %v244
        %v603 = vsub.f32 %v595, %v245
        %v604 = vsub.f32 %v596, %v246
        %606 = vset.pattern.permute.xlu0 0
        %607 = vperm.xlu0 %606, %v597
        %v608 = vpop.permute.xlu0 %607
        %611 = vset.pattern.permute.xlu0 0
        %612 = vperm.xlu0 %611, %v598
        %v613 = vpop.permute.xlu0 %612
        %616 = vset.pattern.permute.xlu0 0
        %617 = vperm.xlu0 %616, %v599
        %v618 = vpop.permute.xlu0 %617
        %621 = vset.pattern.permute.xlu0 0
        %622 = vperm.xlu0 %621, %v600
        %v623 = vpop.permute.xlu0 %622
        %v625 = vmul.f32 %v608, %v601
        %v626 = vmul.f32 %v613, %v602
        %v627 = vmul.f32 %v618, %v603
        %v628 = vmul.f32 %v623, %v604
        %v629 = vadd.f32 %v243, %v625
        %v630 = vadd.f32 %v244, %v626
        %v631 = vadd.f32 %v245, %v627
        %v632 = vadd.f32 %v246, %v628
        %v633 = vmul.f32 %v629, %v629
        %v634 = vmul.f32 %v630, %v630
        %v635 = vmul.f32 %v631, %v631
        %v636 = vmul.f32 %v632, %v632
        %v637 = vadd.f32 %v633, %v634
        %v638 = vadd.f32 %v637, %v635
        %v639 = vadd.f32 %v638, %v636
        %v640 = vrot.slane %v639, 4
        %v641 = vadd.f32 %v639, %v640
        %v642 = vrot.slane %v641, 2
        %v643 = vadd.f32 %v641, %v642
        %v644 = vrot.slane %v643, 1
        %v645 = vadd.f32 %v643, %v644
        %v646 = vmax.f32 %v645, 1e-24
        %v647 = vrsqrt.pop %v646
        %v648 = vmul.f32 %v629, %v647
        %v649 = vmul.f32 %v630, %v647
        %v650 = vmul.f32 %v631, %v647
        %v651 = vmul.f32 %v632, %v647
        %652 = vst [vmem:[%s242] sm:$0xff] %v648
        %653 = vst [vmem:[%s242 + $0x8] sm:$0xff] %v649
        %654 = vst [vmem:[%s242 + $0x10] sm:$0xff] %v650
        %655 = vst [vmem:[%s242 + $0x18] sm:$0xff] %v651
        %s656 = sand.u32 %s115, 1
        %s657 = scalar_lea.sflag [#allocation4], %s656
        %s658 = sand.u32 %s115, 1
        %s659 = smul.addr %s658, 32
        %s660 = scalar_lea.vmem [#allocation3], %s659
        // Predicated region
        $region75: #{tpu_custom_call.1} parent=69 // pred_check
          %p661 = pneg %p125
        $region76: #{tpu_custom_call.1} parent=69 // pred_check_branch
          %663 = sbr.rel (%p661) target = $region78
        $region77: #{tpu_custom_call.1} parent=69 // pred_region
          %s665 = ssub.s32 512, 512
          %666 = vsyncadd %s657, %s665
          %s667 = smul.addr %s18, 128
          %s668 = scalar_lea.hbm %s4, %s667
          %s669 = sshll.u32 %s660, 4
          %s670 = int_to_ptr.vmem [resolvable:$true] %s669
          %675 = dma.vmem_to_hbm [thread:$0]  %s670, 512, %s668, %s657, 128, 256, 8
        $region78: #{tpu_custom_call.1} parent=69 // pred_fallthru
          _
      $region70: #{tpu_custom_call.1} parent=5 // pred_fallthru
        _
      %p676 = scmp.le.s32.totalorder 2, %s13
      // Predicated region
      $region79: #{tpu_custom_call.1} parent=5 // pred_check
        %p677 = pneg %p676
      $region80: #{tpu_custom_call.1} parent=5 // pred_check_branch
        %679 = sbr.rel (%p677) target = $region82
      $region81: #{tpu_custom_call.1} parent=5 // pred_region
        %s680 = ssub.s32 %s13, 2
        // Predicated region
        $region83: #{tpu_custom_call.1} parent=81 // pred_check
          %p681 = pneg %p131
        $region84: #{tpu_custom_call.1} parent=81 // pred_check_branch
          %683 = sbr.rel (%p681) target = $region86
        $region85: #{tpu_custom_call.1} parent=81 // pred_region
          %s684 = sand.u32 %s116, 1
          %s685 = scalar_lea.sflag [#allocation4], %s684
          %s686 = sand.u32 %s116, 1
          %s687 = smul.addr %s686, 32
          %s688 = scalar_lea.vmem [#allocation3], %s687
          %689 = dma.done %s685, 512
        $region86: #{tpu_custom_call.1} parent=81 // pred_fallthru
          _
      $region82: #{tpu_custom_call.1} parent=5 // pred_fallthru
        _
    $region6: #{tpu_custom_call.1} parent=1 // loop_footer
      %s17 = sadd.s32 1, %s13
    $region7: #{tpu_custom_call.1} parent=1 // loop_footer_branch
      %12 = sbr.rel target = $region3
    $region8: #{tpu_custom_call.1} parent=1 // loop_exit
      _
    %690 = vsyncpa [#allocation4], 1
    %s691 = scalar_lea.sflag [#allocation4], 1
    %692 = vsyncpa %s691, 1

</llo_original>
